<compile_context>
chip_gen: v5e
topology: v5e:2x2
jax: 0.10.0
libtpu: 0.0.40
codegen_flags: <defaults>
</compile_context>

<pallas_src>
import jax
import jax.numpy as jnp
import numpy as np
from jax.experimental import pallas as pl
from jax.experimental.pallas import tpu as pltpu

EPS = 1e-5
LANE = 128


def _round_up(x, m):
    return (x + m - 1) // m * m


# ---------------- Pass 1: per-channel sum / sum-of-squares of y = P @ W ----------------
def _stats_kernel(p_ref, w_ref, sum_ref, sq_ref):
    # p_ref: [TM, KP] bf16 patches tile, w_ref: [KP, OCP] bf16 weights
    # sum_ref / sq_ref: [1, OCP] f32 accumulators, resident across the whole grid.
    @pl.when(pl.program_id(0) == 0)
    def _():
        sum_ref[...] = jnp.zeros_like(sum_ref)
        sq_ref[...] = jnp.zeros_like(sq_ref)

    y = jnp.dot(p_ref[...], w_ref[...], preferred_element_type=jnp.float32)  # [TM, OCP] f32
    sum_ref[...] += jnp.sum(y, axis=0, keepdims=True)
    sq_ref[...] += jnp.sum(y * y, axis=0, keepdims=True)


# ---------------- Pass 2: recompute y, apply fused BN scale/shift + ReLU ----------------
def _apply_kernel(p_ref, w_ref, scale_ref, shift_ref, o_ref):
    y = jnp.dot(p_ref[...], w_ref[...], preferred_element_type=jnp.float32)  # [TM, OCP] f32
    o_ref[...] = jnp.maximum(y * scale_ref[...] + shift_ref[...], 0.0)


def _im2col(x, k, stride):
    # x: [N, C, H, W] -> patches [N*OH*OW, C*k*k], feature order (C, KH, KW).
    # TODO(synk): fuse patch extraction into the kernel (shift-and-matmul / manual DMA)
    # to avoid materializing the k^2/stride^2-expanded patch tensor in HBM.
    n, c, h, w = x.shape
    oh = (h - k) // stride + 1
    ow = (w - k) // stride + 1
    i_idx = (jnp.arange(oh) * stride)[:, None] + jnp.arange(k)[None, :]  # [OH, K]
    j_idx = (jnp.arange(ow) * stride)[:, None] + jnp.arange(k)[None, :]  # [OW, K]
    p = x[:, :, i_idx, :]                      # [N, C, OH, K, W]
    p = p[:, :, :, :, j_idx]                   # [N, C, OH, K, OW, K]
    p = jnp.transpose(p, (0, 2, 4, 1, 3, 5))   # [N, OH, OW, C, KH, KW]
    return p.reshape(n * oh * ow, c * k * k), oh, ow


def conv_block(x, conv_w, conv_b, gamma, beta, *, k=4, stride=2, tm_max=1024):
    # x: [N, C_in, H, W] (NCHW, PyTorch convention)
    # conv_w: [OC, C_in, k, k]; conv_b/gamma/beta: [OC]
    n, c_in, h, w = x.shape
    oc = conv_w.shape[0]

    patches, oh, ow = _im2col(x, k, stride)          # [M, Kdim] f32
    m, kdim = patches.shape

    kp = _round_up(kdim, LANE)       # padded contraction depth (MXU-aligned)
    ocp = _round_up(oc, LANE)        # padded, lane-dense output channels

    # M tile: multiple of 8, capped at tm_max (<=1024 keeps double-buffered tiles
    # ~2 MiB -> safe for v7x's 64 MiB VMEM; can be raised to ~2048 on v5e/v6e).
    tm = min(tm_max, _round_up(m, 8))
    m_pad = _round_up(m, tm)
    n_tiles = m_pad // tm

    # Zero-pad patches / weights. Zero patch rows give y == 0 (no conv bias in the
    # kernel), so padding does not perturb the BN statistics; divide by true M below.
    patches_p = jnp.zeros((m_pad, kp), jnp.bfloat16).at[:m, :kdim].set(
        patches.astype(jnp.bfloat16))
    w2d = conv_w.reshape(oc, kdim).T                                    # [Kdim, OC]
    w_p = jnp.zeros((kp, ocp), jnp.bfloat16).at[:kdim, :oc].set(
        w2d.astype(jnp.bfloat16))

    # Conv bias is intentionally unused: train-mode BatchNorm's mean subtraction
    # cancels any per-channel constant exactly ((y+b) - mean(y+b) == y - mean(y)).
    del conv_b

    vmem_limit = 32 * 1024 * 1024
    cparams_acc = pltpu.CompilerParams(
        dimension_semantics=("arbitrary",),       # resident accumulator across the grid
        vmem_limit_bytes=vmem_limit)
    cparams_par = pltpu.CompilerParams(
        dimension_semantics=("parallel",),        # independent tiles -> both v7x cores
        vmem_limit_bytes=vmem_limit)

    # ---- Pass 1: per-channel sums ----
    sums, sqs = pl.pallas_call(
        _stats_kernel,
        out_shape=(jax.ShapeDtypeStruct((1, ocp), jnp.float32),
                   jax.ShapeDtypeStruct((1, ocp), jnp.float32)),
        grid=(n_tiles,),
        in_specs=[
            pl.BlockSpec((tm, kp), lambda i: (i, 0)),
            pl.BlockSpec((kp, ocp), lambda i: (0, 0)),
        ],
        out_specs=(
            pl.BlockSpec((1, ocp), lambda i: (0, 0)),
            pl.BlockSpec((1, ocp), lambda i: (0, 0)),
        ),
        compiler_params=cparams_acc,
    )(patches_p, w_p)

    # ---- Tiny per-channel epilogue math ([1, OCP]) in plain JAX ----
    m_f = jnp.float32(m)
    mean = sums / m_f
    var = jnp.maximum(sqs / m_f - mean * mean, 0.0)   # clamp guards E[y^2]-E[y]^2 cancellation
    inv = jax.lax.rsqrt(var + EPS)
    g_p = jnp.zeros((1, ocp), jnp.float32).at[0, :oc].set(gamma)
    b_p = jnp.zeros((1, ocp), jnp.float32).at[0, :oc].set(beta)
    scale = g_p * inv                 # [1, OCP]
    shift = b_p - mean * scale        # [1, OCP]

    # ---- Pass 2: normalize + ReLU ----
    out_p = pl.pallas_call(
        _apply_kernel,
        out_shape=jax.ShapeDtypeStruct((m_pad, ocp), jnp.float32),
        grid=(n_tiles,),
        in_specs=[
            pl.BlockSpec((tm, kp), lambda i: (i, 0)),
            pl.BlockSpec((kp, ocp), lambda i: (0, 0)),
            pl.BlockSpec((1, ocp), lambda i: (0, 0)),
            pl.BlockSpec((1, ocp), lambda i: (0, 0)),
        ],
        out_specs=pl.BlockSpec((tm, ocp), lambda i: (i, 0)),
        compiler_params=cparams_par,
    )(patches_p, w_p, scale, shift)

    out2d = out_p[:m, :oc]                           # drop padded rows / channels
    out = out2d.reshape(n, oh, ow, oc)
    return jnp.transpose(out, (0, 3, 1, 2))          # back to NCHW (module convention)


def conv_block_reference(x, conv_w, conv_b, gamma, beta, *, stride=2):
    # Pure-JAX f32 reference (keeps the conv bias — it is cancelled by train-mode BN,
    # which also validates dropping it in the kernel).
    y = jax.lax.conv_general_dilated(
        x, conv_w, window_strides=(stride, stride), padding="VALID",
        dimension_numbers=("NCHW", "OIHW", "NCHW"))
    y = y + conv_b[None, :, None, None]
    mean = jnp.mean(y, axis=(0, 2, 3), keepdims=True)
    var = jnp.mean((y - mean) ** 2, axis=(0, 2, 3), keepdims=True)
    y_hat = (y - mean) * jax.lax.rsqrt(var + EPS)
    z = y_hat * gamma[None, :, None, None] + beta[None, :, None, None]
    return jnp.maximum(z, 0.0)


if __name__ == "__main__":
    key = jax.random.PRNGKey(0)
    k_x, k_w, k_b, k_g, k_be = jax.random.split(key, 5)

    N, C_IN, H, W = 2, 4, 16, 16
    OC, K, STRIDE = 8, 4, 2

    x = jax.random.normal(k_x, (N, C_IN, H, W), dtype=jnp.float32)
    conv_w = jax.random.normal(k_w, (OC, C_IN, K, K), dtype=jnp.float32) * 0.1
    conv_b = jax.random.normal(k_b, (OC,), dtype=jnp.float32) * 0.1
    gamma = 1.0 + 0.1 * jax.random.normal(k_g, (OC,), dtype=jnp.float32)
    beta = 0.1 * jax.random.normal(k_be, (OC,), dtype=jnp.float32)

    out = conv_block(x, conv_w, conv_b, gamma, beta, k=K, stride=STRIDE)
    out = jax.block_until_ready(out)

    ref = jax.block_until_ready(
        conv_block_reference(x, conv_w, conv_b, gamma, beta, stride=STRIDE))
    # Matmul inputs are bf16 on the MXU path, so compare with bf16-level tolerance.
    np.testing.assert_allclose(np.asarray(out), np.asarray(ref),
                               rtol=2e-2, atol=2e-2)

    assert out.shape == (N, OC, (H - K) // STRIDE + 1, (W - K) // STRIDE + 1)
    print("KERNEL_OK")
</pallas_src>

<mosaic_0001>
module attributes {stable_mosaic.version = 11 : i64} {
  func.func @_stats_kernel(%arg0: i32, %arg1: memref<104x128xbf16, #tpu.memory_space<vmem>>, %arg2: memref<128x128xbf16, #tpu.memory_space<vmem>>, %arg3: memref<1x128xf32, #tpu.memory_space<vmem>>, %arg4: memref<1x128xf32, #tpu.memory_space<vmem>>) attributes {dimension_semantics = [#tpu.dimension_semantics<arbitrary>], iteration_bounds = array<i64: 1>, scalar_prefetch = 0 : i64, scratch_operands = 0 : i64, tpu.core_type = #tpu.core_type<tc>, window_params = [{transform_indices = @transform_0, window_bounds = array<i64: 104, 128>}, {pipeline_mode = #tpu.pipeline_mode<synchronous>, transform_indices = @transform_1, window_bounds = array<i64: 128, 128>}, {pipeline_mode = #tpu.pipeline_mode<synchronous>, transform_indices = @transform_2, window_bounds = array<i64: 1, 128>}, {pipeline_mode = #tpu.pipeline_mode<synchronous>, transform_indices = @transform_3, window_bounds = array<i64: 1, 128>}]} {
    %c0_i32 = arith.constant 0 : i32
    %0 = arith.cmpi eq, %arg0, %c0_i32 : i32
    %1 = arith.extui %0 : i1 to i32
    %c0_i32_0 = arith.constant 0 : i32
    %2 = arith.cmpi ne, %1, %c0_i32_0 : i32
    scf.if %2 {
      %cst_14 = arith.constant 0.000000e+00 : f32
      %17 = vector.broadcast %cst_14 : f32 to vector<1x128xf32>
      %c0_15 = arith.constant 0 : index
      %c0_16 = arith.constant 0 : index
      %18 = vector.load %arg3[%c0_15, %c0_16] : memref<1x128xf32, #tpu.memory_space<vmem>>, vector<1x128xf32>
      tpu.vector_store %arg3[%c0_15, %c0_16], %17 {strides = array<i32>} : memref<1x128xf32, #tpu.memory_space<vmem>>, vector<1x128xf32>,
      %cst_17 = arith.constant 0.000000e+00 : f32
      %19 = vector.broadcast %cst_17 : f32 to vector<1x128xf32>
      %c0_18 = arith.constant 0 : index
      %c0_19 = arith.constant 0 : index
      %20 = vector.load %arg4[%c0_18, %c0_19] : memref<1x128xf32, #tpu.memory_space<vmem>>, vector<1x128xf32>
      tpu.vector_store %arg4[%c0_18, %c0_19], %19 {strides = array<i32>} : memref<1x128xf32, #tpu.memory_space<vmem>>, vector<1x128xf32>,
    } else {
    }
    %c0 = arith.constant 0 : index
    %c0_1 = arith.constant 0 : index
    %3 = vector.load %arg1[%c0, %c0_1] : memref<104x128xbf16, #tpu.memory_space<vmem>>, vector<104x128xbf16>
    %c0_2 = arith.constant 0 : index
    %c0_3 = arith.constant 0 : index
    %4 = vector.load %arg2[%c0_2, %c0_3] : memref<128x128xbf16, #tpu.memory_space<vmem>>, vector<128x128xbf16>
    %cst = arith.constant dense<0.000000e+00> : vector<104x128xf32>
    %5 = tpu.matmul %3, %4, %cst {dimension_numbers = #tpu.dot_dimension_numbers<[1], [0], [0], [1], [0, 0, 1, 1], [], []>} : vector<104x128xbf16>, vector<128x128xbf16>, vector<104x128xf32> -> vector<104x128xf32>
    %c0_4 = arith.constant 0 : index
    %c0_5 = arith.constant 0 : index
    %6 = vector.load %arg3[%c0_4, %c0_5] : memref<1x128xf32, #tpu.memory_space<vmem>>, vector<1x128xf32>
    %cst_6 = arith.constant dense<0.000000e+00> : vector<128xf32>
    %7 = vector.multi_reduction <add>, %5, %cst_6 [0] : vector<104x128xf32> to vector<128xf32>
    %8 = vector.shape_cast %7 : vector<128xf32> to vector<1x128xf32>
    %9 = arith.addf %6, %8 : vector<1x128xf32>
    %c0_7 = arith.constant 0 : index
    %c0_8 = arith.constant 0 : index
    %10 = vector.load %arg3[%c0_7, %c0_8] : memref<1x128xf32, #tpu.memory_space<vmem>>, vector<1x128xf32>
    tpu.vector_store %arg3[%c0_7, %c0_8], %9 {strides = array<i32>} : memref<1x128xf32, #tpu.memory_space<vmem>>, vector<1x128xf32>,
    %c0_9 = arith.constant 0 : index
    %c0_10 = arith.constant 0 : index
    %11 = vector.load %arg4[%c0_9, %c0_10] : memref<1x128xf32, #tpu.memory_space<vmem>>, vector<1x128xf32>
    %12 = arith.mulf %5, %5 : vector<104x128xf32>
    %cst_11 = arith.constant dense<0.000000e+00> : vector<128xf32>
    %13 = vector.multi_reduction <add>, %12, %cst_11 [0] : vector<104x128xf32> to vector<128xf32>
    %14 = vector.shape_cast %13 : vector<128xf32> to vector<1x128xf32>
    %15 = arith.addf %11, %14 : vector<1x128xf32>
    %c0_12 = arith.constant 0 : index
    %c0_13 = arith.constant 0 : index
    %16 = vector.load %arg4[%c0_12, %c0_13] : memref<1x128xf32, #tpu.memory_space<vmem>>, vector<1x128xf32>
    tpu.vector_store %arg4[%c0_12, %c0_13], %15 {strides = array<i32>} : memref<1x128xf32, #tpu.memory_space<vmem>>, vector<1x128xf32>,
    return
  }
  func.func @transform_0(%arg0: i32) -> (i32, i32) {
    %c0_i32 = arith.constant 0 : i32
    %c0_i32_0 = arith.constant 0 : i32
    return %arg0, %c0_i32 : i32, i32
  }
  func.func @transform_1(%arg0: i32) -> (i32, i32) {
    %c0_i32 = arith.constant 0 : i32
    %c0_i32_0 = arith.constant 0 : i32
    %c0_i32_1 = arith.constant 0 : i32
    return %c0_i32, %c0_i32_0 : i32, i32
  }
  func.func @transform_2(%arg0: i32) -> (i32, i32) {
    %c0_i32 = arith.constant 0 : i32
    %c0_i32_0 = arith.constant 0 : i32
    %c0_i32_1 = arith.constant 0 : i32
    return %c0_i32, %c0_i32_0 : i32, i32
  }
  func.func @transform_3(%arg0: i32) -> (i32, i32) {
    %c0_i32 = arith.constant 0 : i32
    %c0_i32_0 = arith.constant 0 : i32
    %c0_i32_1 = arith.constant 0 : i32
    return %c0_i32, %c0_i32_0 : i32, i32
  }
}

</mosaic_0001>

<llo_original>
// kernel: tpu_custom_call.1
$region0: #{tpu_custom_call.1}
  #allocation0 [shape = 'u32[]', space=smem, size = 0x4, offset = 0x4, fixed_abs, tag = 'smem constant byte address 0x4 - core index']
  #allocation1 [shape = 'u32[72,128]{1,0:T(1,128)}', space=vmem, size = 0x9000, scoped, tag = 'internal scratch']
  %s0 = inlined_call_operand.hbm [shape: bf16[104,128], index: 0, kind: input, shape index: {}]
  %s1 = inlined_call_operand.hbm [shape: bf16[128,128], index: 1, kind: input, shape index: {}]
  %s2 = inlined_call_operand.hbm [shape: f32[1,128], index: 2, kind: output, shape index: {0}]
  %s3 = inlined_call_operand.hbm [shape: f32[1,128], index: 3, kind: output, shape index: {1}]
  %4 = xla_tuple %s2, %s3
  %s5 = sld [smem:[#allocation0]]
  $region38: #{tpu_custom_call.1} parent=0
    _
  %s7 = ssub.s32 1, %s5
  %s8 = scalar_select 0, %s7, %s5
  $region1: #{tpu_custom_call.1} parent=0
    #allocation2 [shape = 'u8[26624]{0}', space=vmem, size = 0x6800, scoped, tag = 'input window, operand 0, single buffered']
    #allocation3 [shape = 's32[1]{0}', space=sflag, size = 0x4, scoped, tag = 'scoped memory for tpu_custom_call.1']
    #allocation4 [shape = 's32[1]{0}', space=sflag, size = 0x4, scoped, tag = 'scoped memory for tpu_custom_call.1']
    #allocation5 [shape = 'u8[32768]{0}', space=vmem, size = 0x8000, scoped, tag = 'input window, operand 1, single buffered']
    #allocation6 [shape = 's32[1]{0}', space=sflag, size = 0x4, scoped, tag = 'scoped memory for tpu_custom_call.1']
    #allocation7 [shape = 'u8[512]{0}', space=vmem, size = 0x400, scoped, tag = 'output window, operand 0, single buffered']
    #allocation8 [shape = 'u8[512]{0}', space=vmem, size = 0x400, scoped, tag = 'output window, operand 1, single buffered']
    #allocation9 [shape = 's32[1]{0}', space=sflag, size = 0x4, scoped, tag = 'scoped memory for tpu_custom_call.1']
    %9 = vsyncpa [#allocation3], 0
    %10 = vsyncpa [#allocation6], 0
    %11 = vsyncpa [#allocation4], 0
    %12 = vsyncpa [#allocation9], 0
    // Predicated region
    $region2: #{tpu_custom_call.1} parent=1 // pred_check
      _
    $region3: #{tpu_custom_call.1} parent=1 // pred_check_branch
      %14 = sbr.rel (0) target = $region5
    $region4: #{tpu_custom_call.1} parent=1 // pred_region
      %16 = vsyncadd [#allocation3], 0
      %s17 = sshll.u32 %s0, 4
      %s18 = int_to_ptr.hbm [resolvable:$true] %s17
      %s19 = sshll.u32 [#allocation2], 4
      %s20 = int_to_ptr.vmem [resolvable:$true] %s19
      %25 = dma.hbm_to_vmem [thread:$0]  %s18, 832, %s20, [#allocation3], 64, 64, 4
    $region5: #{tpu_custom_call.1} parent=1 // pred_fallthru
      _
    // Predicated region
    $region6: #{tpu_custom_call.1} parent=1 // pred_check
      _
    $region7: #{tpu_custom_call.1} parent=1 // pred_check_branch
      %27 = sbr.rel (0) target = $region9
    $region8: #{tpu_custom_call.1} parent=1 // pred_region
      %29 = vsyncadd [#allocation6], 0
      %s30 = sshll.u32 %s1, 4
      %s31 = int_to_ptr.hbm [resolvable:$true] %s30
      %s32 = sshll.u32 [#allocation5], 4
      %s33 = int_to_ptr.vmem [resolvable:$true] %s32
      %38 = dma.hbm_to_vmem [thread:$0]  %s31, 1024, %s33, [#allocation6], 64, 64, 4
    $region9: #{tpu_custom_call.1} parent=1 // pred_fallthru
      _
    // Predicated region
    $region10: #{tpu_custom_call.1} parent=1 // pred_check
      _
    $region11: #{tpu_custom_call.1} parent=1 // pred_check_branch
      %40 = sbr.rel (0) target = $region13
    $region12: #{tpu_custom_call.1} parent=1 // pred_region
      %42 = dma.done [#allocation3], 832
    $region13: #{tpu_custom_call.1} parent=1 // pred_fallthru
      _
    // Predicated region
    $region14: #{tpu_custom_call.1} parent=1 // pred_check
      _
    $region15: #{tpu_custom_call.1} parent=1 // pred_check_branch
      %44 = sbr.rel (0) target = $region17
    $region16: #{tpu_custom_call.1} parent=1 // pred_region
      %46 = dma.done [#allocation6], 1024
    $region17: #{tpu_custom_call.1} parent=1 // pred_fallthru
      _
    %p47 = scmp.eq.s32.totalorder 0, 0
    // Predicated region
    $region18: #{tpu_custom_call.1} parent=1 // pred_check
      %p48 = pneg %p47
    $region19: #{tpu_custom_call.1} parent=1 // pred_check_branch
      %50 = sbr.rel (%p48) target = $region21
    $region20: #{tpu_custom_call.1} parent=1 // pred_region
      %51 = vst [vmem:[#allocation7] sm:$0x1] 0.0
      %52 = vst [vmem:[#allocation8] sm:$0x1] 0.0
    $region21: #{tpu_custom_call.1} parent=1 // pred_fallthru
      _
    %v53 = vld [vmem:[#allocation2] sm:$0xf]
    %v54 = vld [vmem:[#allocation2 + $0x4] sm:$0xf]
    %v55 = vld [vmem:[#allocation2 + $0x8] sm:$0xf]
    %v56 = vld [vmem:[#allocation2 + $0xc] sm:$0xf]
    %v57 = vld [vmem:[#allocation2 + $0x10] sm:$0xf]
    %v58 = vld [vmem:[#allocation2 + $0x14] sm:$0xf]
    %v59 = vld [vmem:[#allocation2 + $0x18] sm:$0xf]
    %v60 = vld [vmem:[#allocation2 + $0x1c] sm:$0xf]
    %v61 = vld [vmem:[#allocation2 + $0x20] sm:$0xf]
    %v62 = vld [vmem:[#allocation2 + $0x24] sm:$0xf]
    %v63 = vld [vmem:[#allocation2 + $0x28] sm:$0xf]
    %v64 = vld [vmem:[#allocation2 + $0x2c] sm:$0xf]
    %v65 = vld [vmem:[#allocation2 + $0x30] sm:$0xf]
    %v66 = vld [vmem:[#allocation5] sm:$0xf]
    %v67 = vld [vmem:[#allocation5 + $0x4] sm:$0xf]
    %v68 = vld [vmem:[#allocation5 + $0x8] sm:$0xf]
    %v69 = vld [vmem:[#allocation5 + $0xc] sm:$0xf]
    %v70 = vld [vmem:[#allocation5 + $0x10] sm:$0xf]
    %v71 = vld [vmem:[#allocation5 + $0x14] sm:$0xf]
    %v72 = vld [vmem:[#allocation5 + $0x18] sm:$0xf]
    %v73 = vld [vmem:[#allocation5 + $0x1c] sm:$0xf]
    %v74 = vld [vmem:[#allocation5 + $0x20] sm:$0xf]
    %v75 = vld [vmem:[#allocation5 + $0x24] sm:$0xf]
    %v76 = vld [vmem:[#allocation5 + $0x28] sm:$0xf]
    %v77 = vld [vmem:[#allocation5 + $0x2c] sm:$0xf]
    %v78 = vld [vmem:[#allocation5 + $0x30] sm:$0xf]
    %v79 = vld [vmem:[#allocation5 + $0x34] sm:$0xf]
    %v80 = vld [vmem:[#allocation5 + $0x38] sm:$0xf]
    %v81 = vld [vmem:[#allocation5 + $0x3c] sm:$0xf]
    %v95 = vunpack.c.l.b16 %v53
    %v96 = vunpack.c.l.b16 %v54
    %v97 = vunpack.c.l.b16 %v55
    %v98 = vunpack.c.l.b16 %v56
    %v99 = vunpack.c.l.b16 %v57
    %v100 = vunpack.c.l.b16 %v58
    %v101 = vunpack.c.l.b16 %v59
    %v102 = vunpack.c.l.b16 %v60
    %v103 = vunpack.c.l.b16 %v61
    %v104 = vunpack.c.l.b16 %v62
    %v105 = vunpack.c.l.b16 %v63
    %v106 = vunpack.c.l.b16 %v64
    %v107 = vunpack.c.l.b16 %v65
    %v108 = vpack.c.b16 %v96, %v95
    %v109 = vpack.c.b16 %v98, %v97
    %v110 = vpack.c.b16 %v100, %v99
    %v111 = vpack.c.b16 %v102, %v101
    %v112 = vpack.c.b16 %v104, %v103
    %v113 = vpack.c.b16 %v106, %v105
    %v114 = vpack.c.b16 %v107, %v107
    %v138 = vunpack.c.l.b16 %v66
    %v139 = vunpack.c.l.b16 %v67
    %v140 = vunpack.c.l.b16 %v68
    %v141 = vunpack.c.l.b16 %v69
    %v142 = vunpack.c.l.b16 %v70
    %v143 = vunpack.c.l.b16 %v71
    %v144 = vunpack.c.l.b16 %v72
    %v145 = vunpack.c.l.b16 %v73
    %v146 = vunpack.c.l.b16 %v74
    %v147 = vunpack.c.l.b16 %v75
    %v148 = vunpack.c.l.b16 %v76
    %v149 = vunpack.c.l.b16 %v77
    %v150 = vunpack.c.l.b16 %v78
    %v151 = vunpack.c.l.b16 %v79
    %v152 = vunpack.c.l.b16 %v80
    %v153 = vunpack.c.l.b16 %v81
    %v154 = vpack.c.b16 %v139, %v138
    %v155 = vpack.c.b16 %v141, %v140
    %v156 = vpack.c.b16 %v143, %v142
    %v157 = vpack.c.b16 %v145, %v144
    %v158 = vpack.c.b16 %v147, %v146
    %v159 = vpack.c.b16 %v149, %v148
    %v160 = vpack.c.b16 %v151, %v150
    %v161 = vpack.c.b16 %v153, %v152
    %170 = vmatpush.bf16.msra.mxu0 %v161
    %171 = vmatpush.bf16.msra.mxu0 %v160
    %172 = vmatpush.bf16.msra.mxu0 %v159
    %173 = vmatpush.bf16.msra.mxu0 %v158
    %174 = vmatpush.bf16.msra.mxu0 %v157
    %175 = vmatpush.bf16.msra.mxu0 %v156
    %176 = vmatpush.bf16.msra.mxu0 %v155
    %177 = vmatpush.bf16.msra.mxu0 %v154
    %178 = vmatmul.bf16.gmra.mxu0 %v108
    %v179 = vpop.f32.mrf.mxu0
    %v180 = vadd.f32 0.0, %v179
    %v181 = vpop.f32.mrf.mxu0
    %v182 = vadd.f32 0.0, %v181
    %183 = vmatmul.bf16.gmra.mxu0 %v109
    %v184 = vpop.f32.mrf.mxu0
    %v185 = vadd.f32 0.0, %v184
    %v186 = vpop.f32.mrf.mxu0
    %v187 = vadd.f32 0.0, %v186
    %188 = vmatmul.bf16.gmra.mxu0 %v110
    %v189 = vpop.f32.mrf.mxu0
    %v190 = vadd.f32 0.0, %v189
    %v191 = vpop.f32.mrf.mxu0
    %v192 = vadd.f32 0.0, %v191
    %193 = vmatmul.bf16.gmra.mxu0 %v111
    %v194 = vpop.f32.mrf.mxu0
    %v195 = vadd.f32 0.0, %v194
    %v196 = vpop.f32.mrf.mxu0
    %v197 = vadd.f32 0.0, %v196
    %198 = vmatmul.bf16.gmra.mxu0 %v112
    %v199 = vpop.f32.mrf.mxu0
    %v200 = vadd.f32 0.0, %v199
    %v201 = vpop.f32.mrf.mxu0
    %v202 = vadd.f32 0.0, %v201
    %203 = vmatmul.bf16.gmra.mxu0 %v113
    %v204 = vpop.f32.mrf.mxu0
    %v205 = vadd.f32 0.0, %v204
    %v206 = vpop.f32.mrf.mxu0
    %v207 = vadd.f32 0.0, %v206
    %208 = vmatmul.bf16.gmra.mxu0 %v114
    %v209 = vpop.f32.mrf.mxu0
    %v210 = vadd.f32 0.0, %v209
    %v211 = vpop.f32.mrf.mxu0
    %212 = vdwg.mxu0
    %v213 = vld [vmem:[#allocation7] sm:$0x1]
    %v214 = vadd.f32 %v180, %v182
    %v215 = vadd.f32 %v214, %v185
    %v216 = vadd.f32 %v215, %v187
    %v217 = vadd.f32 %v216, %v190
    %v218 = vadd.f32 %v217, %v192
    %v219 = vadd.f32 %v218, %v195
    %v220 = vadd.f32 %v219, %v197
    %v221 = vadd.f32 %v220, %v200
    %v222 = vadd.f32 %v221, %v202
    %v223 = vadd.f32 %v222, %v205
    %v224 = vadd.f32 %v223, %v207
    %v225 = vadd.f32 %v224, %v210
    %v226 = vrot.slane %v225, 4
    %v227 = vadd.f32 %v225, %v226
    %v228 = vrot.slane %v227, 2
    %v229 = vadd.f32 %v227, %v228
    %v230 = vrot.slane %v229, 1
    %v231 = vadd.f32 %v229, %v230
    %v232 = vadd.f32 %v213, %v231
    %233 = vst [vmem:[#allocation7] sm:$0x1] %v232
    %v234 = vld [vmem:[#allocation8] sm:$0x1]
    %v235 = vmul.f32 %v180, %v180
    %v236 = vmul.f32 %v182, %v182
    %v237 = vmul.f32 %v185, %v185
    %v238 = vmul.f32 %v187, %v187
    %v239 = vmul.f32 %v190, %v190
    %v240 = vmul.f32 %v192, %v192
    %v241 = vmul.f32 %v195, %v195
    %v242 = vmul.f32 %v197, %v197
    %v243 = vmul.f32 %v200, %v200
    %v244 = vmul.f32 %v202, %v202
    %v245 = vmul.f32 %v205, %v205
    %v246 = vmul.f32 %v207, %v207
    %v247 = vmul.f32 %v210, %v210
    %v248 = vadd.f32 %v235, %v236
    %v249 = vadd.f32 %v248, %v237
    %v250 = vadd.f32 %v249, %v238
    %v251 = vadd.f32 %v250, %v239
    %v252 = vadd.f32 %v251, %v240
    %v253 = vadd.f32 %v252, %v241
    %v254 = vadd.f32 %v253, %v242
    %v255 = vadd.f32 %v254, %v243
    %v256 = vadd.f32 %v255, %v244
    %v257 = vadd.f32 %v256, %v245
    %v258 = vadd.f32 %v257, %v246
    %v259 = vadd.f32 %v258, %v247
    %v260 = vrot.slane %v259, 4
    %v261 = vadd.f32 %v259, %v260
    %v262 = vrot.slane %v261, 2
    %v263 = vadd.f32 %v261, %v262
    %v264 = vrot.slane %v263, 1
    %v265 = vadd.f32 %v263, %v264
    %v266 = vadd.f32 %v234, %v265
    %267 = vst [vmem:[#allocation8] sm:$0x1] %v266
    // Predicated region
    $region22: #{tpu_custom_call.1} parent=1 // pred_check
      _
    $region23: #{tpu_custom_call.1} parent=1 // pred_check_branch
      %269 = sbr.rel (0) target = $region25
    $region24: #{tpu_custom_call.1} parent=1 // pred_region
      %271 = vsyncadd [#allocation4], 0
      %s273 = sshll.u32 [#allocation7], 4
      %s274 = int_to_ptr.vmem [resolvable:$true] %s273
      %s275 = sshll.u32 %s2, 4
      %s276 = int_to_ptr.hbm [resolvable:$true] %s275
      %278 = dma.vmem_to_hbm [thread:$0]  %s274, 16, %s276, [#allocation4]
    $region25: #{tpu_custom_call.1} parent=1 // pred_fallthru
      _
    // Predicated region
    $region26: #{tpu_custom_call.1} parent=1 // pred_check
      _
    $region27: #{tpu_custom_call.1} parent=1 // pred_check_branch
      %280 = sbr.rel (0) target = $region29
    $region28: #{tpu_custom_call.1} parent=1 // pred_region
      %282 = vsyncadd [#allocation9], 0
      %s284 = sshll.u32 [#allocation8], 4
      %s285 = int_to_ptr.vmem [resolvable:$true] %s284
      %s286 = sshll.u32 %s3, 4
      %s287 = int_to_ptr.hbm [resolvable:$true] %s286
      %289 = dma.vmem_to_hbm [thread:$0]  %s285, 16, %s287, [#allocation9]
    $region29: #{tpu_custom_call.1} parent=1 // pred_fallthru
      _
    // Predicated region
    $region30: #{tpu_custom_call.1} parent=1 // pred_check
      _
    $region31: #{tpu_custom_call.1} parent=1 // pred_check_branch
      %291 = sbr.rel (0) target = $region33
    $region32: #{tpu_custom_call.1} parent=1 // pred_region
      %293 = dma.done [#allocation4], 16
    $region33: #{tpu_custom_call.1} parent=1 // pred_fallthru
      _
    // Predicated region
    $region34: #{tpu_custom_call.1} parent=1 // pred_check
      _
    $region35: #{tpu_custom_call.1} parent=1 // pred_check_branch
      %295 = sbr.rel (0) target = $region37
    $region36: #{tpu_custom_call.1} parent=1 // pred_region
      %297 = dma.done [#allocation9], 16
    $region37: #{tpu_custom_call.1} parent=1 // pred_fallthru
      _
    %298 = vsyncpa [#allocation3], 1
    %299 = vsyncpa [#allocation6], 1
    %300 = vsyncpa [#allocation4], 1
    %301 = vsyncpa [#allocation9], 1

</llo_original>
